<compile_context>
chip_gen: v5e
topology: v5e:2x2
jax: 0.10.0
libtpu: 0.0.40
codegen_flags: <defaults>
</compile_context>

<pallas_src>
import functools

import jax
import jax.numpy as jnp
from jax.experimental import pallas as pl
from jax.experimental.pallas import tpu as pltpu

_D_IN, _H1, _H2, _D_OUT = 45, 64, 32, 16
_PAD = 64  # all inner dims padded to 64 -> every matmul is (block,64)@(64,64)


def _mlp_kernel(x_ref, w_ref, b_ref, o_ref):
    # Layer 1: Linear(45->64) + ReLU   (Dropout = identity in eval mode)
    h = jnp.dot(x_ref[...], w_ref[0], preferred_element_type=jnp.float32)
    h = jnp.maximum(h + b_ref[0], 0.0)
    # Layer 2: Linear(64->32) + ReLU
    h = jnp.dot(h.astype(jnp.bfloat16), w_ref[1], preferred_element_type=jnp.float32)
    h = jnp.maximum(h + b_ref[1], 0.0)
    # Layer 3: Linear(32->16) + ReLU
    h = jnp.dot(h.astype(jnp.bfloat16), w_ref[2], preferred_element_type=jnp.float32)
    h = jnp.maximum(h + b_ref[2], 0.0)
    o_ref[...] = h[:, :_D_OUT].astype(o_ref.dtype)


def _round_up(n, m):
    return ((n + m - 1) // m) * m


def _pack_params(params):
    """Pack (w1,b1,w2,b2,w3,b3) into one bf16 weight slab + one f32 bias slab."""
    w1, b1, w2, b2, w3, b3 = params
    W = jnp.zeros((3, _PAD, _PAD), jnp.float32)
    W = W.at[0, :_D_IN, :_H1].set(w1)
    W = W.at[1, :_H1, :_H2].set(w2)
    W = W.at[2, :_H2, :_D_OUT].set(w3)
    Bb = jnp.zeros((3, 1, _PAD), jnp.float32)
    Bb = Bb.at[0, 0, :_H1].set(b1.reshape(-1))
    Bb = Bb.at[1, 0, :_H2].set(b2.reshape(-1))
    Bb = Bb.at[2, 0, :_D_OUT].set(b3.reshape(-1))
    return W.astype(jnp.bfloat16), Bb


@functools.partial(jax.jit, static_argnames=("block_b",))
def metadata_mlp_forward(x, params, *, block_b=512):
    """x: (B, 45) float32.  Returns (B, 16) float32."""
    B, d_in = x.shape
    assert d_in == _D_IN

    W, Bb = _pack_params(params)

    # Batch tiling: one block when B is small, otherwise block_b rows per grid
    # step (multiple of 8); zero-padded tail handles arbitrary B.
    block_b = _round_up(max(block_b, 8), 8)
    block = min(block_b, _round_up(B, 8))
    b_pad = _round_up(B, block)
    grid = (b_pad // block,)

    # Zero-pad batch tail and features 45 -> 64 (padded columns contribute 0).
    x_p = jnp.zeros((b_pad, _PAD), jnp.bfloat16)
    x_p = x_p.at[:B, :_D_IN].set(x.astype(jnp.bfloat16))

    flops = 2 * B * (_D_IN * _H1 + _H1 * _H2 + _H2 * _D_OUT)
    bytes_accessed = (b_pad * _PAD * 2          # x (bf16)
                      + b_pad * _D_OUT * 4      # out (f32)
                      + W.size * 2 + Bb.size * 4)

    out = pl.pallas_call(
        _mlp_kernel,
        out_shape=jax.ShapeDtypeStruct((b_pad, _D_OUT), jnp.float32),
        grid_spec=pl.GridSpec(
            grid=grid,
            in_specs=[
                pl.BlockSpec((block, _PAD), lambda i: (i, 0)),       # x tile
                pl.BlockSpec((3, _PAD, _PAD), lambda i: (0, 0, 0)),  # weight slab
                pl.BlockSpec((3, 1, _PAD), lambda i: (0, 0, 0)),     # bias slab
            ],
            out_specs=pl.BlockSpec((block, _D_OUT), lambda i: (i, 0)),
        ),
        compiler_params=pltpu.CompilerParams(
            # batch tiles are independent -> shardable over v7x's 2 TCs
            dimension_semantics=("parallel",),
        ),
        cost_estimate=pl.CostEstimate(
            flops=flops, transcendentals=0, bytes_accessed=bytes_accessed),
    )(x_p, W, Bb)
    return out[:B]


def init_params(key):
    """Deterministic init matching nn.Linear shapes.

    PyTorch stores Linear weight as (out, in); here we keep the transposed
    (in, out) layout so the kernel does x @ W + b.
    """
    dims = [(_D_IN, _H1), (_H1, _H2), (_H2, _D_OUT)]
    params = []
    keys = jax.random.split(key, len(dims) * 2)
    for li, (d_in, d_out) in enumerate(dims):
        kw, kb = keys[2 * li], keys[2 * li + 1]
        bound = 1.0 / jnp.sqrt(d_in)
        w = jax.random.uniform(kw, (d_in, d_out), jnp.float32, -bound, bound)
        b = jax.random.uniform(kb, (1, d_out), jnp.float32, -bound, bound)
        params.extend([w, b])
    return tuple(params)


def reference_forward(x, params):
    w1, b1, w2, b2, w3, b3 = params
    h = jnp.maximum(x @ w1 + b1, 0.0)
    h = jnp.maximum(h @ w2 + b2, 0.0)
    return jnp.maximum(h @ w3 + b3, 0.0)


if __name__ == "__main__":
    key = jax.random.PRNGKey(0)
    k_x, k_x2, k_p = jax.random.split(key, 3)

    params = init_params(k_p)

    # Case 1: small batch (single grid step, block collapses to B).
    B = 8
    x = jax.random.normal(k_x, (B, _D_IN), jnp.float32)
    out = jax.block_until_ready(metadata_mlp_forward(x, params))
    ref = reference_forward(x, params)
    assert out.shape == (B, _D_OUT), out.shape
    # bf16 MXU operands vs f32 reference -> loose tolerance.
    assert jnp.allclose(out, ref, atol=5e-2, rtol=5e-2), (
        float(jnp.max(jnp.abs(out - ref))))

    # Case 2: non-divisible batch with multiple grid steps (exercises the
    # padded tail and the multi-tile "parallel" batch axis).
    B2 = 200
    x2 = jax.random.normal(k_x2, (B2, _D_IN), jnp.float32)
    out2 = jax.block_until_ready(metadata_mlp_forward(x2, params, block_b=64))
    ref2 = reference_forward(x2, params)
    assert out2.shape == (B2, _D_OUT), out2.shape
    assert jnp.allclose(out2, ref2, atol=5e-2, rtol=5e-2), (
        float(jnp.max(jnp.abs(out2 - ref2))))

    print("KERNEL_OK")
</pallas_src>

<mosaic_0001>
module attributes {stable_mosaic.version = 11 : i64} {
  func.func @_mlp_kernel(%arg0: i32, %arg1: memref<8x64xbf16, #tpu.memory_space<vmem>>, %arg2: memref<3x64x64xbf16, #tpu.memory_space<vmem>>, %arg3: memref<3x1x64xf32, #tpu.memory_space<vmem>>, %arg4: memref<8x16xf32, #tpu.memory_space<vmem>>) attributes {dimension_semantics = [#tpu.dimension_semantics<parallel>], iteration_bounds = array<i64: 1>, scalar_prefetch = 0 : i64, scratch_operands = 0 : i64, tpu.core_type = #tpu.core_type<tc>, window_params = [{transform_indices = @transform_0, window_bounds = array<i64: 8, 64>}, {pipeline_mode = #tpu.pipeline_mode<synchronous>, transform_indices = @transform_1, window_bounds = array<i64: 3, 64, 64>}, {pipeline_mode = #tpu.pipeline_mode<synchronous>, transform_indices = @transform_2, window_bounds = array<i64: 3, 1, 64>}, {transform_indices = @transform_3, window_bounds = array<i64: 8, 16>}]} {
    %c0 = arith.constant 0 : index
    %c0_0 = arith.constant 0 : index
    %0 = vector.load %arg1[%c0, %c0_0] : memref<8x64xbf16, #tpu.memory_space<vmem>>, vector<8x64xbf16>
    %c0_1 = arith.constant 0 : index
    %c0_2 = arith.constant 0 : index
    %c0_3 = arith.constant 0 : index
    %1 = vector.load %arg2[%c0_1, %c0_2, %c0_3] : memref<3x64x64xbf16, #tpu.memory_space<vmem>>, vector<1x64x64xbf16>
    %2 = vector.shape_cast %1 : vector<1x64x64xbf16> to vector<64x64xbf16>
    %cst = arith.constant dense<0.000000e+00> : vector<8x64xf32>
    %3 = tpu.matmul %0, %2, %cst {dimension_numbers = #tpu.dot_dimension_numbers<[1], [0], [0], [1], [0, 0, 1, 1], [], []>} : vector<8x64xbf16>, vector<64x64xbf16>, vector<8x64xf32> -> vector<8x64xf32>
    %c0_4 = arith.constant 0 : index
    %c0_5 = arith.constant 0 : index
    %c0_6 = arith.constant 0 : index
    %4 = vector.load %arg3[%c0_4, %c0_5, %c0_6] : memref<3x1x64xf32, #tpu.memory_space<vmem>>, vector<1x1x64xf32>
    %5 = vector.shape_cast %4 : vector<1x1x64xf32> to vector<1x64xf32>
    %6 = vector.broadcast %5 : vector<1x64xf32> to vector<8x64xf32>
    %7 = arith.addf %3, %6 : vector<8x64xf32>
    %cst_7 = arith.constant 0.000000e+00 : f32
    %8 = vector.broadcast %cst_7 : f32 to vector<8x64xf32>
    %9 = arith.maximumf %7, %8 : vector<8x64xf32>
    %10 = arith.truncf %9 : vector<8x64xf32> to vector<8x64xbf16>
    %c1 = arith.constant 1 : index
    %c0_8 = arith.constant 0 : index
    %c0_9 = arith.constant 0 : index
    %11 = vector.load %arg2[%c1, %c0_8, %c0_9] : memref<3x64x64xbf16, #tpu.memory_space<vmem>>, vector<1x64x64xbf16>
    %12 = vector.shape_cast %11 : vector<1x64x64xbf16> to vector<64x64xbf16>
    %cst_10 = arith.constant dense<0.000000e+00> : vector<8x64xf32>
    %13 = tpu.matmul %10, %12, %cst_10 {dimension_numbers = #tpu.dot_dimension_numbers<[1], [0], [0], [1], [0, 0, 1, 1], [], []>} : vector<8x64xbf16>, vector<64x64xbf16>, vector<8x64xf32> -> vector<8x64xf32>
    %c1_11 = arith.constant 1 : index
    %c0_12 = arith.constant 0 : index
    %c0_13 = arith.constant 0 : index
    %14 = vector.load %arg3[%c1_11, %c0_12, %c0_13] : memref<3x1x64xf32, #tpu.memory_space<vmem>>, vector<1x1x64xf32>
    %15 = vector.shape_cast %14 : vector<1x1x64xf32> to vector<1x64xf32>
    %16 = vector.broadcast %15 : vector<1x64xf32> to vector<8x64xf32>
    %17 = arith.addf %13, %16 : vector<8x64xf32>
    %cst_14 = arith.constant 0.000000e+00 : f32
    %18 = vector.broadcast %cst_14 : f32 to vector<8x64xf32>
    %19 = arith.maximumf %17, %18 : vector<8x64xf32>
    %20 = arith.truncf %19 : vector<8x64xf32> to vector<8x64xbf16>
    %c2 = arith.constant 2 : index
    %c0_15 = arith.constant 0 : index
    %c0_16 = arith.constant 0 : index
    %21 = vector.load %arg2[%c2, %c0_15, %c0_16] : memref<3x64x64xbf16, #tpu.memory_space<vmem>>, vector<1x64x64xbf16>
    %22 = vector.shape_cast %21 : vector<1x64x64xbf16> to vector<64x64xbf16>
    %cst_17 = arith.constant dense<0.000000e+00> : vector<8x64xf32>
    %23 = tpu.matmul %20, %22, %cst_17 {dimension_numbers = #tpu.dot_dimension_numbers<[1], [0], [0], [1], [0, 0, 1, 1], [], []>} : vector<8x64xbf16>, vector<64x64xbf16>, vector<8x64xf32> -> vector<8x64xf32>
    %c2_18 = arith.constant 2 : index
    %c0_19 = arith.constant 0 : index
    %c0_20 = arith.constant 0 : index
    %24 = vector.load %arg3[%c2_18, %c0_19, %c0_20] : memref<3x1x64xf32, #tpu.memory_space<vmem>>, vector<1x1x64xf32>
    %25 = vector.shape_cast %24 : vector<1x1x64xf32> to vector<1x64xf32>
    %26 = vector.broadcast %25 : vector<1x64xf32> to vector<8x64xf32>
    %27 = arith.addf %23, %26 : vector<8x64xf32>
    %cst_21 = arith.constant 0.000000e+00 : f32
    %28 = vector.broadcast %cst_21 : f32 to vector<8x64xf32>
    %29 = arith.maximumf %27, %28 : vector<8x64xf32>
    %30 = vector.extract_strided_slice %29 {offsets = [0, 0], sizes = [8, 16], strides = [1, 1]} : vector<8x64xf32> to vector<8x16xf32>
    %c0_22 = arith.constant 0 : index
    %c0_23 = arith.constant 0 : index
    %31 = vector.load %arg4[%c0_22, %c0_23] : memref<8x16xf32, #tpu.memory_space<vmem>>, vector<8x16xf32>
    tpu.vector_store %arg4[%c0_22, %c0_23], %30 {strides = array<i32>} : memref<8x16xf32, #tpu.memory_space<vmem>>, vector<8x16xf32>,
    return
  }
  func.func @transform_0(%arg0: i32) -> (i32, i32) {
    %c0_i32 = arith.constant 0 : i32
    %c0_i32_0 = arith.constant 0 : i32
    return %arg0, %c0_i32 : i32, i32
  }
  func.func @transform_1(%arg0: i32) -> (i32, i32, i32) {
    %c0_i32 = arith.constant 0 : i32
    %c0_i32_0 = arith.constant 0 : i32
    %c0_i32_1 = arith.constant 0 : i32
    %c0_i32_2 = arith.constant 0 : i32
    return %c0_i32, %c0_i32_0, %c0_i32_1 : i32, i32, i32
  }
  func.func @transform_2(%arg0: i32) -> (i32, i32, i32) {
    %c0_i32 = arith.constant 0 : i32
    %c0_i32_0 = arith.constant 0 : i32
    %c0_i32_1 = arith.constant 0 : i32
    %c0_i32_2 = arith.constant 0 : i32
    return %c0_i32, %c0_i32_0, %c0_i32_1 : i32, i32, i32
  }
  func.func @transform_3(%arg0: i32) -> (i32, i32) {
    %c0_i32 = arith.constant 0 : i32
    %c0_i32_0 = arith.constant 0 : i32
    return %arg0, %c0_i32 : i32, i32
  }
}

</mosaic_0001>

<llo_original>
// kernel: metadata_mlp_forward.1
$region0: #{metadata_mlp_forward.1}
  #allocation0 [shape = 'u32[]', space=smem, size = 0x4, offset = 0x4, fixed_abs, tag = 'smem constant byte address 0x4 - core index']
  #allocation1 [shape = 'u32[72,128]{1,0:T(1,128)}', space=vmem, size = 0x9000, scoped, tag = 'internal scratch']
  %s0 = inlined_call_operand.vmem [shape: bf16[8,64], index: 0, kind: input, shape index: {}]
  %s1 = inlined_call_operand.vmem [shape: bf16[3,64,64], index: 1, kind: input, shape index: {}]
  %s2 = inlined_call_operand.vmem [shape: f32[3,1,64], index: 2, kind: input, shape index: {}]
  %s3 = inlined_call_operand.hbm [shape: f32[8,16], index: 3, kind: output, shape index: {}]
  %s4 = sld [smem:[#allocation0]]
  $region22: #{metadata_mlp_forward.1} parent=0
    _
  %s6 = ssub.s32 1, %s4
  %s7 = scalar_select 0, %s6, %s4
  $region1: #{metadata_mlp_forward.1} parent=0
    #allocation2 [shape = 'u8[4096]{0}', space=vmem, size = 0x1000, scoped, tag = 'output window, operand 0, single buffered']
    #allocation3 [shape = 's32[1]{0}', space=sflag, size = 0x4, scoped, tag = 'scoped memory for metadata_mlp_forward.1']
    %8 = vsyncpa [#allocation3], 0
    // Predicated region
    $region2: #{metadata_mlp_forward.1} parent=1 // pred_check
      _
    $region3: #{metadata_mlp_forward.1} parent=1 // pred_check_branch
      %10 = sbr.rel (0) target = $region5
    $region4: #{metadata_mlp_forward.1} parent=1 // pred_region
      _
    $region5: #{metadata_mlp_forward.1} parent=1 // pred_fallthru
      _
    // Predicated region
    $region6: #{metadata_mlp_forward.1} parent=1 // pred_check
      _
    $region7: #{metadata_mlp_forward.1} parent=1 // pred_check_branch
      %12 = sbr.rel (0) target = $region9
    $region8: #{metadata_mlp_forward.1} parent=1 // pred_region
      _
    $region9: #{metadata_mlp_forward.1} parent=1 // pred_fallthru
      _
    // Predicated region
    $region10: #{metadata_mlp_forward.1} parent=1 // pred_check
      _
    $region11: #{metadata_mlp_forward.1} parent=1 // pred_check_branch
      %14 = sbr.rel (0) target = $region13
    $region12: #{metadata_mlp_forward.1} parent=1 // pred_region
      _
    $region13: #{metadata_mlp_forward.1} parent=1 // pred_fallthru
      _
    %v16 = vld [vmem:[%s0] sm:$0xf]
    %v17 = vld [vmem:[%s1] sm:$0xf]
    %v18 = vld [vmem:[%s1 + $0x4] sm:$0xf]
    %v19 = vld [vmem:[%s1 + $0x8] sm:$0xf]
    %v20 = vld [vmem:[%s1 + $0xc] sm:$0xf]
    %v21 = vld [vmem:[%s1 + $0x10] sm:$0xf]
    %v22 = vld [vmem:[%s1 + $0x14] sm:$0xf]
    %v23 = vld [vmem:[%s1 + $0x18] sm:$0xf]
    %v24 = vld [vmem:[%s1 + $0x1c] sm:$0xf]
    %v25 = vld [vmem:[%s2] sm:$0x1]
    %v27 = vperm.slane %v25, 0
    %v37 = vunpack.c.l.b16 %v17
    %v38 = vunpack.c.l.b16 %v18
    %v39 = vunpack.c.l.b16 %v19
    %v40 = vunpack.c.l.b16 %v20
    %v41 = vunpack.c.l.b16 %v21
    %v42 = vunpack.c.l.b16 %v22
    %v43 = vunpack.c.l.b16 %v23
    %v44 = vunpack.c.l.b16 %v24
    %v45 = vpack.c.b16 %v38, %v37
    %v46 = vpack.c.b16 %v40, %v39
    %v47 = vpack.c.b16 %v42, %v41
    %v48 = vpack.c.b16 %v44, %v43
    %vm53 = vcmask 523264
    %v55 = vsel %vm53, %v16, 0
    %57 = vmatpush.bf16.msra.mxu0 0
    %58 = vmatpush.bf16.msra.mxu0 0
    %59 = vmatpush.bf16.msra.mxu0 0
    %60 = vmatpush.bf16.msra.mxu0 0
    %61 = vmatpush.bf16.msra.mxu0 %v48
    %62 = vmatpush.bf16.msra.mxu0 %v47
    %63 = vmatpush.bf16.msra.mxu0 %v46
    %64 = vmatpush.bf16.msra.mxu0 %v45
    %65 = vmatmul.bf16.gmra.mxu0 %v55
    %v66 = vpop.f32.mrf.mxu0
    %v67 = vadd.f32 %v27, %v66
    %v68 = vpop.f32.mrf.mxu0
    %69 = vdwg.mxu0
    %v70 = vmax.f32 %v67, 0.0
    %v71 = vpack.c.bf16 %v70, %v70
    %s72 = scalar_lea.vmem %s1, 32
    %v73 = vld [vmem:[%s72] sm:$0xf]
    %v74 = vld [vmem:[%s72 + $0x4] sm:$0xf]
    %v75 = vld [vmem:[%s72 + $0x8] sm:$0xf]
    %v76 = vld [vmem:[%s72 + $0xc] sm:$0xf]
    %v77 = vld [vmem:[%s72 + $0x10] sm:$0xf]
    %v78 = vld [vmem:[%s72 + $0x14] sm:$0xf]
    %v79 = vld [vmem:[%s72 + $0x18] sm:$0xf]
    %v80 = vld [vmem:[%s72 + $0x1c] sm:$0xf]
    %s81 = scalar_lea.vmem %s2, 1
    %v82 = vld [vmem:[%s81] sm:$0x1]
    %v84 = vperm.slane %v82, 0
    %v94 = vunpack.c.l.b16 %v73
    %v95 = vunpack.c.l.b16 %v74
    %v96 = vunpack.c.l.b16 %v75
    %v97 = vunpack.c.l.b16 %v76
    %v98 = vunpack.c.l.b16 %v77
    %v99 = vunpack.c.l.b16 %v78
    %v100 = vunpack.c.l.b16 %v79
    %v101 = vunpack.c.l.b16 %v80
    %v102 = vpack.c.b16 %v95, %v94
    %v103 = vpack.c.b16 %v97, %v96
    %v104 = vpack.c.b16 %v99, %v98
    %v105 = vpack.c.b16 %v101, %v100
    %v111 = vsel %vm53, %v71, 0
    %113 = vmatpush.bf16.msra.mxu0 0
    %114 = vmatpush.bf16.msra.mxu0 0
    %115 = vmatpush.bf16.msra.mxu0 0
    %116 = vmatpush.bf16.msra.mxu0 0
    %117 = vmatpush.bf16.msra.mxu0 %v105
    %118 = vmatpush.bf16.msra.mxu0 %v104
    %119 = vmatpush.bf16.msra.mxu0 %v103
    %120 = vmatpush.bf16.msra.mxu0 %v102
    %121 = vmatmul.bf16.gmra.mxu0 %v111
    %v122 = vpop.f32.mrf.mxu0
    %v123 = vadd.f32 %v84, %v122
    %v124 = vpop.f32.mrf.mxu0
    %125 = vdwg.mxu0
    %v126 = vmax.f32 %v123, 0.0
    %v127 = vpack.c.bf16 %v126, %v126
    %s128 = scalar_lea.vmem %s1, 64
    %v129 = vld [vmem:[%s128] sm:$0xf]
    %v130 = vld [vmem:[%s128 + $0x4] sm:$0xf]
    %v131 = vld [vmem:[%s128 + $0x8] sm:$0xf]
    %v132 = vld [vmem:[%s128 + $0xc] sm:$0xf]
    %v133 = vld [vmem:[%s128 + $0x10] sm:$0xf]
    %v134 = vld [vmem:[%s128 + $0x14] sm:$0xf]
    %v135 = vld [vmem:[%s128 + $0x18] sm:$0xf]
    %v136 = vld [vmem:[%s128 + $0x1c] sm:$0xf]
    %s137 = scalar_lea.vmem %s2, 2
    %v138 = vld [vmem:[%s137] sm:$0x1]
    %v140 = vperm.slane %v138, 0
    %v150 = vunpack.c.l.b16 %v129
    %v151 = vunpack.c.l.b16 %v130
    %v152 = vunpack.c.l.b16 %v131
    %v153 = vunpack.c.l.b16 %v132
    %v154 = vunpack.c.l.b16 %v133
    %v155 = vunpack.c.l.b16 %v134
    %v156 = vunpack.c.l.b16 %v135
    %v157 = vunpack.c.l.b16 %v136
    %v158 = vpack.c.b16 %v151, %v150
    %v159 = vpack.c.b16 %v153, %v152
    %v160 = vpack.c.b16 %v155, %v154
    %v161 = vpack.c.b16 %v157, %v156
    %v167 = vsel %vm53, %v127, 0
    %169 = vmatpush.bf16.msra.mxu0 0
    %170 = vmatpush.bf16.msra.mxu0 0
    %171 = vmatpush.bf16.msra.mxu0 0
    %172 = vmatpush.bf16.msra.mxu0 0
    %173 = vmatpush.bf16.msra.mxu0 %v161
    %174 = vmatpush.bf16.msra.mxu0 %v160
    %175 = vmatpush.bf16.msra.mxu0 %v159
    %176 = vmatpush.bf16.msra.mxu0 %v158
    %177 = vmatmul.bf16.gmra.mxu0 %v167
    %v178 = vpop.f32.mrf.mxu0
    %v179 = vadd.f32 %v140, %v178
    %v180 = vpop.f32.mrf.mxu0
    %181 = vdwg.mxu0
    %v182 = vmax.f32 %v179, 0.0
    %vm183 = vcmask 130048
    %184 = vst.msk [vmem:[#allocation2] sm:$0xff] %vm183, %v182
    // Predicated region
    $region14: #{metadata_mlp_forward.1} parent=1 // pred_check
      _
    $region15: #{metadata_mlp_forward.1} parent=1 // pred_check_branch
      %186 = sbr.rel (0) target = $region17
    $region16: #{metadata_mlp_forward.1} parent=1 // pred_region
      %188 = vsyncadd [#allocation3], 0
      %s190 = sshll.u32 [#allocation2], 4
      %s191 = int_to_ptr.vmem [resolvable:$true] %s190
      %s192 = sshll.u32 %s3, 4
      %s193 = int_to_ptr.hbm [resolvable:$true] %s192
      %195 = dma.vmem_to_hbm [thread:$0]  %s191, 128, %s193, [#allocation3]
    $region17: #{metadata_mlp_forward.1} parent=1 // pred_fallthru
      _
    // Predicated region
    $region18: #{metadata_mlp_forward.1} parent=1 // pred_check
      _
    $region19: #{metadata_mlp_forward.1} parent=1 // pred_check_branch
      %197 = sbr.rel (0) target = $region21
    $region20: #{metadata_mlp_forward.1} parent=1 // pred_region
      %199 = dma.done [#allocation3], 128
    $region21: #{metadata_mlp_forward.1} parent=1 // pred_fallthru
      _
    %200 = vsyncpa [#allocation3], 1

</llo_original>
